<compile_context>
chip_gen: v7x
topology: tpu7x:2x2x1
jax: 0.10.0
libtpu: 0.0.40
codegen_flags: <defaults>
</compile_context>

<pallas_src>
import functools

import jax
import jax.numpy as jnp
from jax.experimental import pallas as pl
from jax.experimental.pallas import tpu as pltpu


def _zdisc_kernel(x_ref, w1_ref, b1_ref, w2_ref, b2_ref, w3_ref, b3_ref, o_ref,
                  *, act_dtype):
    # x_ref:  (C_in, TM) f32            w1_ref: (D, C_in) bf16
    # w2_ref: (D, D) bf16               w3_ref: (1, D) bf16
    # b1_ref, b2_ref: (D, 1) act_dtype  b3_ref: (1,) f32 in SMEM
    # o_ref:  (1, TM) f32
    x = x_ref[...].astype(jnp.bfloat16)                      # cast in-kernel

    # layer 1: (D, C_in) @ (C_in, TM) -> (D, TM), f32 accumulation on MXU.
    h1 = jnp.dot(w1_ref[...], x, preferred_element_type=jnp.float32)
    h1 = h1.astype(act_dtype) + b1_ref[...]
    h1 = jnp.maximum(h1, 0.2 * h1)                           # leaky_relu(0.2)

    # layer 2: (D, D) @ (D, TM) -> (D, TM)
    h2 = jnp.dot(w2_ref[...], h1.astype(jnp.bfloat16),
                 preferred_element_type=jnp.float32)
    h2 = h2.astype(act_dtype) + b2_ref[...]
    h2 = jnp.maximum(h2, 0.2 * h2)                           # leaky_relu(0.2)

    # layer 3 on the (mostly idle) MXU: (1, D) @ (D, TM) -> (1, TM), f32 acc.
    h3 = jnp.dot(w3_ref[...], h2.astype(jnp.bfloat16),
                 preferred_element_type=jnp.float32) + b3_ref[0]

    # sigmoid: exp + reciprocal both land on the EUP slot.
    o_ref[...] = pl.reciprocal(1.0 + jnp.exp(-h3))


@jax.jit
def zdiscriminator_forward(x_nchw, params):
    """x_nchw: (N, C_in, H, W) float32.  Returns (N, 1, H, W) float32."""
    w1, b1, w2, b2, w3, b3 = params
    n, c_in, h, w = x_nchw.shape
    d = w1.shape[0]
    hw = h * w

    # bf16 elementwise path only where the VPU is bf16-native (v6e / v7x).
    kind = jax.devices()[0].device_kind.lower()
    bf16_act = ("v6" in kind) or ("v7" in kind)
    act_dtype = jnp.bfloat16 if bf16_act else jnp.float32

    # NCHW -> (N, C_in, H*W): layout-preserving reshape, H*W is lane-dense.
    x3 = x_nchw.reshape(n, c_in, hw)

    # Lane tile along H*W: multiple of 128, large enough to amortize the
    # ~0.35 us per-grid-step overhead, small enough for VMEM on every gen.
    hw128 = ((hw + 127) // 128) * 128
    tm = min(8192, hw128)
    # v7x megacore: keep the ("parallel", "parallel") grid at >= 2 steps.
    if n == 1 and tm == hw128 and hw128 >= 256:
        tm = ((hw128 // 2 + 127) // 128) * 128
    hw_pad = ((hw + tm - 1) // tm) * tm
    if hw_pad != hw:
        x3 = jnp.pad(x3, ((0, 0), (0, 0), (0, hw_pad - hw)))

    # Weights: bf16 matmul operands (f32 accumulation in-kernel).
    w1m = w1.reshape(d, c_in).astype(jnp.bfloat16)            # (D, C_in)
    w2m = w2.reshape(d, d).astype(jnp.bfloat16)               # (D, D)
    w3m = w3.reshape(1, d).astype(jnp.bfloat16)               # (1, D)
    b1m = b1.reshape(d, 1).astype(act_dtype)
    b2m = b2.reshape(d, 1).astype(act_dtype)
    b3m = b3.reshape(1)                                       # SMEM scalar, f32

    grid = (n, hw_pad // tm)
    kernel = functools.partial(_zdisc_kernel, act_dtype=act_dtype)

    out3 = pl.pallas_call(
        kernel,
        out_shape=jax.ShapeDtypeStruct((n, 1, hw_pad), jnp.float32),
        grid=grid,
        in_specs=[
            pl.BlockSpec((None, c_in, tm), lambda b, i: (b, 0, i)),   # x tile
            pl.BlockSpec((d, c_in), lambda b, i: (0, 0)),             # w1
            pl.BlockSpec((d, 1), lambda b, i: (0, 0)),                # b1
            pl.BlockSpec((d, d), lambda b, i: (0, 0)),                # w2
            pl.BlockSpec((d, 1), lambda b, i: (0, 0)),                # b2
            pl.BlockSpec((1, d), lambda b, i: (0, 0)),                # w3
            pl.BlockSpec(memory_space=pltpu.MemorySpace.SMEM),        # b3
        ],
        out_specs=pl.BlockSpec((None, 1, tm), lambda b, i: (b, 0, i)),
        compiler_params=pltpu.CompilerParams(
            dimension_semantics=("parallel", "parallel"),  # megacore-shardable
            vmem_limit_bytes=28 << 20,                     # fits v7x 64 MiB/TC
        ),
    )(x3, w1m, b1m, w2m, b2m, w3m, b3m)

    out3 = out3[:, :, :hw]                                    # drop lane padding
    return out3.reshape(n, 1, h, w)


def make_params(key, z_size, d=128, std=0.02):
    """Deterministic synthetic params matching ZDiscriminator.__init__ shapes.

    Mirrors weight_init(mean=0, std): normal weights, zero biases.
    """
    k1, k2, k3 = jax.random.split(key, 3)
    w1 = std * jax.random.normal(k1, (d, z_size, 1, 1), jnp.float32)
    b1 = jnp.zeros((d,), jnp.float32)
    w2 = std * jax.random.normal(k2, (d, d, 1, 1), jnp.float32)
    b2 = jnp.zeros((d,), jnp.float32)
    w3 = std * jax.random.normal(k3, (1, d, 1, 1), jnp.float32)
    b3 = jnp.zeros((1,), jnp.float32)
    return (w1, b1, w2, b2, w3, b3)


def _reference_forward(x_nchw, params):
    """Pure-JAX f32 reference of the PyTorch forward (sanity check)."""
    w1, b1, w2, b2, w3, b3 = params

    def conv1x1(x, w, b):
        y = jnp.einsum("nihw,oi->nohw", x, w[:, :, 0, 0])
        return y + b[None, :, None, None]

    h = conv1x1(x_nchw, w1, b1)
    h = jnp.where(h >= 0, h, 0.2 * h)
    h = conv1x1(h, w2, b2)
    h = jnp.where(h >= 0, h, 0.2 * h)
    h = conv1x1(h, w3, b3)
    return jax.nn.sigmoid(h)


if __name__ == "__main__":
    key = jax.random.PRNGKey(0)
    kx, kp = jax.random.split(key)

    # Small shapes consistent with the module: batch=2, z_size=8, spatial=4.
    n, z_size, hh, ww = 2, 8, 4, 4
    d = 128

    x = jax.random.normal(kx, (n, z_size, hh, ww), jnp.float32)
    params = make_params(kp, z_size, d=d, std=0.02)

    out = zdiscriminator_forward(x, params)
    out = jax.block_until_ready(out)

    ref = _reference_forward(x, params)
    assert out.shape == (n, 1, hh, ww), out.shape
    # bf16 matmul inputs / activations (f32 accumulation) -> small slack.
    assert jnp.allclose(out, ref, atol=2e-3, rtol=2e-3), float(
        jnp.max(jnp.abs(out - ref))
    )

    print("KERNEL_OK")
</pallas_src>

<mosaic_0001>
module attributes {stable_mosaic.version = 11 : i64} {
  func.func @_zdisc_kernel(%arg0: i32, %arg1: i32, %arg2: memref<1x8x128xf32, #tpu.memory_space<vmem>>, %arg3: memref<128x8xbf16, #tpu.memory_space<vmem>>, %arg4: memref<128x1xf32, #tpu.memory_space<vmem>>, %arg5: memref<128x128xbf16, #tpu.memory_space<vmem>>, %arg6: memref<128x1xf32, #tpu.memory_space<vmem>>, %arg7: memref<1x128xbf16, #tpu.memory_space<vmem>>, %arg8: memref<1xf32, #tpu.memory_space<smem>>, %arg9: memref<1x1x128xf32, #tpu.memory_space<vmem>>) attributes {dimension_semantics = [#tpu.dimension_semantics<parallel>, #tpu.dimension_semantics<parallel>], iteration_bounds = array<i64: 2, 1>, scalar_prefetch = 0 : i64, scratch_operands = 0 : i64, tpu.core_type = #tpu.core_type<tc>, window_params = [{transform_indices = @transform_0, window_bounds = array<i64: 1, 8, 128>}, {pipeline_mode = #tpu.pipeline_mode<synchronous>, transform_indices = @transform_1, window_bounds = array<i64: 128, 8>}, {pipeline_mode = #tpu.pipeline_mode<synchronous>, transform_indices = @transform_2, window_bounds = array<i64: 128, 1>}, {pipeline_mode = #tpu.pipeline_mode<synchronous>, transform_indices = @transform_3, window_bounds = array<i64: 128, 128>}, {pipeline_mode = #tpu.pipeline_mode<synchronous>, transform_indices = @transform_4, window_bounds = array<i64: 128, 1>}, {pipeline_mode = #tpu.pipeline_mode<synchronous>, transform_indices = @transform_5, window_bounds = array<i64: 1, 128>}, {transform_indices = @transform_6, window_bounds = array<i64: 1>}, {transform_indices = @transform_7, window_bounds = array<i64: 1, 1, 128>}]} {
    %c0 = arith.constant 0 : index
    %c0_0 = arith.constant 0 : index
    %c0_1 = arith.constant 0 : index
    %0 = vector.load %arg2[%c0, %c0_0, %c0_1] : memref<1x8x128xf32, #tpu.memory_space<vmem>>, vector<1x8x128xf32>
    %1 = vector.shape_cast %0 : vector<1x8x128xf32> to vector<8x128xf32>
    %2 = arith.truncf %1 : vector<8x128xf32> to vector<8x128xbf16>
    %c0_2 = arith.constant 0 : index
    %c0_3 = arith.constant 0 : index
    %3 = vector.load %arg3[%c0_2, %c0_3] : memref<128x8xbf16, #tpu.memory_space<vmem>>, vector<128x8xbf16>
    %cst = arith.constant dense<0.000000e+00> : vector<128x128xf32>
    %4 = tpu.matmul %3, %2, %cst {dimension_numbers = #tpu.dot_dimension_numbers<[1], [0], [0], [1], [0, 0, 1, 1], [], []>} : vector<128x8xbf16>, vector<8x128xbf16>, vector<128x128xf32> -> vector<128x128xf32>
    %c0_4 = arith.constant 0 : index
    %c0_5 = arith.constant 0 : index
    %5 = vector.load %arg4[%c0_4, %c0_5] : memref<128x1xf32, #tpu.memory_space<vmem>>, vector<128x1xf32>
    %6 = vector.broadcast %5 : vector<128x1xf32> to vector<128x128xf32>
    %7 = arith.addf %4, %6 : vector<128x128xf32>
    %cst_6 = arith.constant 2.000000e-01 : f32
    %8 = vector.broadcast %cst_6 : f32 to vector<128x128xf32>
    %9 = arith.mulf %8, %7 : vector<128x128xf32>
    %10 = arith.maximumf %7, %9 : vector<128x128xf32>
    %c0_7 = arith.constant 0 : index
    %c0_8 = arith.constant 0 : index
    %11 = vector.load %arg5[%c0_7, %c0_8] : memref<128x128xbf16, #tpu.memory_space<vmem>>, vector<128x128xbf16>
    %12 = arith.truncf %10 : vector<128x128xf32> to vector<128x128xbf16>
    %cst_9 = arith.constant dense<0.000000e+00> : vector<128x128xf32>
    %13 = tpu.matmul %11, %12, %cst_9 {dimension_numbers = #tpu.dot_dimension_numbers<[1], [0], [0], [1], [0, 0, 1, 1], [], []>} : vector<128x128xbf16>, vector<128x128xbf16>, vector<128x128xf32> -> vector<128x128xf32>
    %c0_10 = arith.constant 0 : index
    %c0_11 = arith.constant 0 : index
    %14 = vector.load %arg6[%c0_10, %c0_11] : memref<128x1xf32, #tpu.memory_space<vmem>>, vector<128x1xf32>
    %15 = vector.broadcast %14 : vector<128x1xf32> to vector<128x128xf32>
    %16 = arith.addf %13, %15 : vector<128x128xf32>
    %cst_12 = arith.constant 2.000000e-01 : f32
    %17 = vector.broadcast %cst_12 : f32 to vector<128x128xf32>
    %18 = arith.mulf %17, %16 : vector<128x128xf32>
    %19 = arith.maximumf %16, %18 : vector<128x128xf32>
    %c0_13 = arith.constant 0 : index
    %c0_14 = arith.constant 0 : index
    %20 = vector.load %arg7[%c0_13, %c0_14] : memref<1x128xbf16, #tpu.memory_space<vmem>>, vector<1x128xbf16>
    %21 = arith.truncf %19 : vector<128x128xf32> to vector<128x128xbf16>
    %cst_15 = arith.constant dense<0.000000e+00> : vector<1x128xf32>
    %22 = tpu.matmul %20, %21, %cst_15 {dimension_numbers = #tpu.dot_dimension_numbers<[1], [0], [0], [1], [0, 0, 1, 1], [], []>} : vector<1x128xbf16>, vector<128x128xbf16>, vector<1x128xf32> -> vector<1x128xf32>
    %c0_16 = arith.constant 0 : index
    %23 = memref.load %arg8[%c0_16] : memref<1xf32, #tpu.memory_space<smem>>
    %24 = vector.broadcast %23 : f32 to vector<1x128xf32>
    %25 = arith.addf %22, %24 : vector<1x128xf32>
    %cst_17 = arith.constant 0.000000e+00 : f32
    %26 = vector.broadcast %cst_17 : f32 to vector<1x128xf32>
    %27 = arith.subf %26, %25 : vector<1x128xf32>
    %28 = math.exp %27 : vector<1x128xf32>
    %cst_18 = arith.constant 1.000000e+00 : f32
    %29 = vector.broadcast %cst_18 : f32 to vector<1x128xf32>
    %30 = arith.addf %29, %28 : vector<1x128xf32>
    %31 = tpu.reciprocal %30 : vector<1x128xf32> -> vector<1x128xf32>
    %c0_19 = arith.constant 0 : index
    %c0_20 = arith.constant 0 : index
    %c0_21 = arith.constant 0 : index
    %32 = vector.load %arg9[%c0_19, %c0_20, %c0_21] : memref<1x1x128xf32, #tpu.memory_space<vmem>>, vector<1x1x128xf32>
    %33 = vector.shape_cast %32 : vector<1x1x128xf32> to vector<1x128xf32>
    %34 = vector.shape_cast %31 : vector<1x128xf32> to vector<1x1x128xf32>
    tpu.vector_store %arg9[%c0_19, %c0_20, %c0_21], %34 {strides = array<i32>} : memref<1x1x128xf32, #tpu.memory_space<vmem>>, vector<1x1x128xf32>,
    return
  }
  func.func @transform_0(%arg0: i32, %arg1: i32) -> (i32, i32, i32) {
    %c0_i32 = arith.constant 0 : i32
    %c0_i32_0 = arith.constant 0 : i32
    return %arg0, %c0_i32, %arg1 : i32, i32, i32
  }
  func.func @transform_1(%arg0: i32, %arg1: i32) -> (i32, i32) {
    %c0_i32 = arith.constant 0 : i32
    %c0_i32_0 = arith.constant 0 : i32
    %c0_i32_1 = arith.constant 0 : i32
    return %c0_i32, %c0_i32_0 : i32, i32
  }
  func.func @transform_2(%arg0: i32, %arg1: i32) -> (i32, i32) {
    %c0_i32 = arith.constant 0 : i32
    %c0_i32_0 = arith.constant 0 : i32
    %c0_i32_1 = arith.constant 0 : i32
    return %c0_i32, %c0_i32_0 : i32, i32
  }
  func.func @transform_3(%arg0: i32, %arg1: i32) -> (i32, i32) {
    %c0_i32 = arith.constant 0 : i32
    %c0_i32_0 = arith.constant 0 : i32
    %c0_i32_1 = arith.constant 0 : i32
    return %c0_i32, %c0_i32_0 : i32, i32
  }
  func.func @transform_4(%arg0: i32, %arg1: i32) -> (i32, i32) {
    %c0_i32 = arith.constant 0 : i32
    %c0_i32_0 = arith.constant 0 : i32
    %c0_i32_1 = arith.constant 0 : i32
    return %c0_i32, %c0_i32_0 : i32, i32
  }
  func.func @transform_5(%arg0: i32, %arg1: i32) -> (i32, i32) {
    %c0_i32 = arith.constant 0 : i32
    %c0_i32_0 = arith.constant 0 : i32
    %c0_i32_1 = arith.constant 0 : i32
    return %c0_i32, %c0_i32_0 : i32, i32
  }
  func.func @transform_6(%arg0: i32, %arg1: i32) -> i32 {
    %c0_i32 = arith.constant 0 : i32
    %c0_i32_0 = arith.constant 0 : i32
    return %c0_i32 : i32
  }
  func.func @transform_7(%arg0: i32, %arg1: i32) -> (i32, i32, i32) {
    %c0_i32 = arith.constant 0 : i32
    %c0_i32_0 = arith.constant 0 : i32
    return %arg0, %c0_i32, %arg1 : i32, i32, i32
  }
}

</mosaic_0001>

<llo_original>
// kernel: zdiscriminator_forward.1
$region0: #{zdiscriminator_forward.1}
  #allocation0 [shape = 'u32[]', space=smem, size = 0x4, offset = 0x4, fixed_abs, tag = 'smem constant byte address 0x4 - core index']
  #allocation1 [shape = 'u32[144,128]{1,0:T(1,128)}', space=vmem, size = 0x12000, scoped, tag = 'internal scratch']
  #allocation2 [shape = 'f32[1]{0:T(128)S(6)}', space=smem, size = 0x200, scoped, tag = 'scoped memory for zdiscriminator_forward.1']
  %s0 = inlined_call_operand.vmem [shape: f32[2,8,128], index: 0, kind: input, shape index: {}]
  %s1 = inlined_call_operand.vmem [shape: bf16[128,8], index: 1, kind: input, shape index: {}]
  %s2 = inlined_call_operand.vmem [shape: f32[128,1], index: 2, kind: input, shape index: {}]
  %s3 = inlined_call_operand.vmem [shape: bf16[128,128], index: 3, kind: input, shape index: {}]
  %s4 = inlined_call_operand.vmem [shape: f32[128,1], index: 4, kind: input, shape index: {}]
  %s5 = inlined_call_operand.vmem [shape: bf16[1,128], index: 5, kind: input, shape index: {}]
  %s6 = inlined_call_operand.<no memory space> [shape: f32[1], index: 6, kind: input, shape index: {}]
  %s7 = inlined_call_operand.vmem [shape: f32[2,1,128], index: 7, kind: output, shape index: {}]
  %s8 = sld [smem:[#allocation0]]
  $region61: #{zdiscriminator_forward.1} parent=0
    _
  %s10 = ssub.s32 1, %s8
  %s11 = scalar_select 0, %s10, %s8
  %12 = sst [smem:[#allocation2]] %s6
  loop: start=0, step=1, limit=4
  $region2: #{zdiscriminator_forward.1} parent=0 // loop_pre_header
    _
  $region3: #{zdiscriminator_forward.1} parent=0 // loop_header
    %s14 = sphi 0, %s18
    %p15 = scmp.ge.s32.totalorder %s14, 4
    %s21 = sphi 0, %s33
    %s22 = sphi 0, %s29
    %s23 = sphi 0, %s21
    %s24 = sphi 0, %s22
    %s25 = sphi 0, %s23
    %s26 = sphi 0, %s24
    %s38 = sphi 0, %s40
    %s41 = sphi 0, %s38
    %s42 = sphi 0, %s41
    %s58 = sphi 0, %s42
    %s62 = sphi 0, %s62
    %s64 = sphi 0, %s62
    %s65 = sphi 0, %s64
    %s79 = sphi 0, %s65
    %s83 = sphi 0, %s83
    %s85 = sphi 0, %s83
    %s86 = sphi 0, %s85
    %s100 = sphi 0, %s86
    %s104 = sphi 0, %s104
    %s106 = sphi 0, %s104
    %s107 = sphi 0, %s106
    %s121 = sphi 0, %s107
    %s125 = sphi 0, %s125
    %s127 = sphi 0, %s125
    %s128 = sphi 0, %s127
    %s142 = sphi 0, %s128
    %s146 = sphi 0, %s146
    %s148 = sphi 0, %s146
    %s149 = sphi 0, %s148
    %s163 = sphi 0, %s149
    %s167 = sphi 0, %s167
    %s169 = sphi 0, %s167
    %s170 = sphi 0, %s169
    %s184 = sphi 0, %s170
    %s192 = sphi 0, %s194
    %s195 = sphi 0, %s192
    %s196 = sphi 0, %s195
    %s212 = sphi 0, %s196
  $region4: #{zdiscriminator_forward.1} parent=0 // loop_header_branch
    %17 = sbr.rel (%p15) target = $region8
  $region5: #{zdiscriminator_forward.1} parent=0 // loop_body
    %s19 = ssub.s32 %s14, 1
    %s20 = ssub.s32 %s14, 2
    %s27 = sadd.s32 1, %s22
    %p28 = scmp.ge.s32.totalorder %s27, 1
    %s29 = scalar_select %p28, 0, %s27
    %s30 = sadd.s32 1, %s21
    %s31 = scalar_select %p28, %s30, %s21
    %p32 = scmp.ge.s32.totalorder %s31, 2
    %s33 = scalar_select %p32, 0, %s31
    %s34 = ssub.s32 %s21, %s33
    %s35 = ssub.s32 %s22, %s29
    %s36 = sor.u32 %s34, %s35
    %p37 = scmp.eq.s32.totalorder %s36, 0
    %s39 = sadd.s32 %s38, 1
    %s40 = scalar_select %p37, %s38, %s39
    %p43 = pneg %p37
    %p44 = scmp.eq.s32.totalorder %s14, 1
    %p45 = por %p43, %p44
    %p46 = scmp.ne.s32.totalorder %s38, %s41
    %p47 = scmp.eq.s32.totalorder %s14, 0
    %p48 = por %p46, %p47
    %p49 = scmp.ne.s32.totalorder %s38, %s41
    %p50 = scmp.eq.s32.totalorder %s19, 1
    %p51 = por %p49, %p50
    %p52 = scmp.ne.s32.totalorder %s41, %s42
    %p53 = scmp.eq.s32.totalorder %s19, 0
    %p54 = por %p52, %p53
    %p55 = scmp.ne.s32.totalorder %s41, %s42
    %p56 = scmp.eq.s32.totalorder %s20, 1
    %p57 = por %p55, %p56
    %p59 = scmp.ne.s32.totalorder %s42, %s58
    %p60 = scmp.eq.s32.totalorder %s20, 0
    %p61 = por %p59, %p60
    %s63 = sadd.s32 %s62, 1
    %p66 = scmp.eq.s32.totalorder %s14, 1
    %p67 = scmp.ne.s32.totalorder %s62, %s64
    %p68 = scmp.eq.s32.totalorder %s14, 0
    %p69 = por %p67, %p68
    %p70 = scmp.ne.s32.totalorder %s62, %s64
    %p71 = scmp.eq.s32.totalorder %s19, 1
    %p72 = por %p70, %p71
    %p73 = scmp.ne.s32.totalorder %s64, %s65
    %p74 = scmp.eq.s32.totalorder %s19, 0
    %p75 = por %p73, %p74
    %p76 = scmp.ne.s32.totalorder %s64, %s65
    %p77 = scmp.eq.s32.totalorder %s20, 1
    %p78 = por %p76, %p77
    %p80 = scmp.ne.s32.totalorder %s65, %s79
    %p81 = scmp.eq.s32.totalorder %s20, 0
    %p82 = por %p80, %p81
    %s84 = sadd.s32 %s83, 1
    %p87 = scmp.eq.s32.totalorder %s14, 1
    %p88 = scmp.ne.s32.totalorder %s83, %s85
    %p89 = scmp.eq.s32.totalorder %s14, 0
    %p90 = por %p88, %p89
    %p91 = scmp.ne.s32.totalorder %s83, %s85
    %p92 = scmp.eq.s32.totalorder %s19, 1
    %p93 = por %p91, %p92
    %p94 = scmp.ne.s32.totalorder %s85, %s86
    %p95 = scmp.eq.s32.totalorder %s19, 0
    %p96 = por %p94, %p95
    %p97 = scmp.ne.s32.totalorder %s85, %s86
    %p98 = scmp.eq.s32.totalorder %s20, 1
    %p99 = por %p97, %p98
    %p101 = scmp.ne.s32.totalorder %s86, %s100
    %p102 = scmp.eq.s32.totalorder %s20, 0
    %p103 = por %p101, %p102
    %s105 = sadd.s32 %s104, 1
    %p108 = scmp.eq.s32.totalorder %s14, 1
    %p109 = scmp.ne.s32.totalorder %s104, %s106
    %p110 = scmp.eq.s32.totalorder %s14, 0
    %p111 = por %p109, %p110
    %p112 = scmp.ne.s32.totalorder %s104, %s106
    %p113 = scmp.eq.s32.totalorder %s19, 1
    %p114 = por %p112, %p113
    %p115 = scmp.ne.s32.totalorder %s106, %s107
    %p116 = scmp.eq.s32.totalorder %s19, 0
    %p117 = por %p115, %p116
    %p118 = scmp.ne.s32.totalorder %s106, %s107
    %p119 = scmp.eq.s32.totalorder %s20, 1
    %p120 = por %p118, %p119
    %p122 = scmp.ne.s32.totalorder %s107, %s121
    %p123 = scmp.eq.s32.totalorder %s20, 0
    %p124 = por %p122, %p123
    %s126 = sadd.s32 %s125, 1
    %p129 = scmp.eq.s32.totalorder %s14, 1
    %p130 = scmp.ne.s32.totalorder %s125, %s127
    %p131 = scmp.eq.s32.totalorder %s14, 0
    %p132 = por %p130, %p131
    %p133 = scmp.ne.s32.totalorder %s125, %s127
    %p134 = scmp.eq.s32.totalorder %s19, 1
    %p135 = por %p133, %p134
    %p136 = scmp.ne.s32.totalorder %s127, %s128
    %p137 = scmp.eq.s32.totalorder %s19, 0
    %p138 = por %p136, %p137
    %p139 = scmp.ne.s32.totalorder %s127, %s128
    %p140 = scmp.eq.s32.totalorder %s20, 1
    %p141 = por %p139, %p140
    %p143 = scmp.ne.s32.totalorder %s128, %s142
    %p144 = scmp.eq.s32.totalorder %s20, 0
    %p145 = por %p143, %p144
    %s147 = sadd.s32 %s146, 1
    %p150 = scmp.eq.s32.totalorder %s14, 1
    %p151 = scmp.ne.s32.totalorder %s146, %s148
    %p152 = scmp.eq.s32.totalorder %s14, 0
    %p153 = por %p151, %p152
    %p154 = scmp.ne.s32.totalorder %s146, %s148
    %p155 = scmp.eq.s32.totalorder %s19, 1
    %p156 = por %p154, %p155
    %p157 = scmp.ne.s32.totalorder %s148, %s149
    %p158 = scmp.eq.s32.totalorder %s19, 0
    %p159 = por %p157, %p158
    %p160 = scmp.ne.s32.totalorder %s148, %s149
    %p161 = scmp.eq.s32.totalorder %s20, 1
    %p162 = por %p160, %p161
    %p164 = scmp.ne.s32.totalorder %s149, %s163
    %p165 = scmp.eq.s32.totalorder %s20, 0
    %p166 = por %p164, %p165
    %s168 = sadd.s32 %s167, 1
    %p171 = scmp.eq.s32.totalorder %s14, 1
    %p172 = scmp.ne.s32.totalorder %s167, %s169
    %p173 = scmp.eq.s32.totalorder %s14, 0
    %p174 = por %p172, %p173
    %p175 = scmp.ne.s32.totalorder %s167, %s169
    %p176 = scmp.eq.s32.totalorder %s19, 1
    %p177 = por %p175, %p176
    %p178 = scmp.ne.s32.totalorder %s169, %s170
    %p179 = scmp.eq.s32.totalorder %s19, 0
    %p180 = por %p178, %p179
    %p181 = scmp.ne.s32.totalorder %s169, %s170
    %p182 = scmp.eq.s32.totalorder %s20, 1
    %p183 = por %p181, %p182
    %p185 = scmp.ne.s32.totalorder %s170, %s184
    %p186 = scmp.eq.s32.totalorder %s20, 0
    %p187 = por %p185, %p186
    %s188 = ssub.s32 %s21, %s33
    %s189 = ssub.s32 %s22, %s29
    %s190 = sor.u32 %s188, %s189
    %p191 = scmp.eq.s32.totalorder %s190, 0
    %s193 = sadd.s32 %s192, 1
    %s194 = scalar_select %p191, %s192, %s193
    %p197 = pneg %p191
    %p198 = scmp.eq.s32.totalorder %s14, 1
    %p199 = por %p197, %p198
    %p200 = scmp.ne.s32.totalorder %s192, %s195
    %p201 = scmp.eq.s32.totalorder %s14, 0
    %p202 = por %p200, %p201
    %p203 = scmp.ne.s32.totalorder %s192, %s195
    %p204 = scmp.eq.s32.totalorder %s19, 1
    %p205 = por %p203, %p204
    %p206 = scmp.ne.s32.totalorder %s195, %s196
    %p207 = scmp.eq.s32.totalorder %s19, 0
    %p208 = por %p206, %p207
    %p209 = scmp.ne.s32.totalorder %s195, %s196
    %p210 = scmp.eq.s32.totalorder %s20, 1
    %p211 = por %p209, %p210
    %p213 = scmp.ne.s32.totalorder %s196, %s212
    %p214 = scmp.eq.s32.totalorder %s20, 0
    %p215 = por %p213, %p214
    %p216 = scmp.le.s32.totalorder 1, %s14
    %p217 = scmp.lt.s32.totalorder %s14, 3
    %p218 = pnand %p216, %p217
    %p219 = pneg %p218
    // Predicated region
    $region9: #{zdiscriminator_forward.1} parent=5 // pred_check
      _
    $region10: #{zdiscriminator_forward.1} parent=5 // pred_check_branch
      %221 = sbr.rel (%p218) target = $region12
    $region11: #{zdiscriminator_forward.1} parent=5 // pred_region
      %s222 = ssub.s32 %s14, 1
      // Predicated region
      $region13: #{zdiscriminator_forward.1} parent=11 // pred_check
        %p223 = pneg %p75
      $region14: #{zdiscriminator_forward.1} parent=11 // pred_check_branch
        %225 = sbr.rel (%p223) target = $region16
      $region15: #{zdiscriminator_forward.1} parent=11 // pred_region
        _
      $region16: #{zdiscriminator_forward.1} parent=11 // pred_fallthru
        _
      // Predicated region
      $region17: #{zdiscriminator_forward.1} parent=11 // pred_check
        %p226 = pneg %p96
      $region18: #{zdiscriminator_forward.1} parent=11 // pred_check_branch
        %228 = sbr.rel (%p226) target = $region20
      $region19: #{zdiscriminator_forward.1} parent=11 // pred_region
        _
      $region20: #{zdiscriminator_forward.1} parent=11 // pred_fallthru
        _
      // Predicated region
      $region21: #{zdiscriminator_forward.1} parent=11 // pred_check
        %p229 = pneg %p117
      $region22: #{zdiscriminator_forward.1} parent=11 // pred_check_branch
        %231 = sbr.rel (%p229) target = $region24
      $region23: #{zdiscriminator_forward.1} parent=11 // pred_region
        _
      $region24: #{zdiscriminator_forward.1} parent=11 // pred_fallthru
        _
      // Predicated region
      $region25: #{zdiscriminator_forward.1} parent=11 // pred_check
        %p232 = pneg %p138
      $region26: #{zdiscriminator_forward.1} parent=11 // pred_check_branch
        %234 = sbr.rel (%p232) target = $region28
      $region27: #{zdiscriminator_forward.1} parent=11 // pred_region
        _
      $region28: #{zdiscriminator_forward.1} parent=11 // pred_fallthru
        _
      // Predicated region
      $region29: #{zdiscriminator_forward.1} parent=11 // pred_check
        %p235 = pneg %p159
      $region30: #{zdiscriminator_forward.1} parent=11 // pred_check_branch
        %237 = sbr.rel (%p235) target = $region32
      $region31: #{zdiscriminator_forward.1} parent=11 // pred_region
        _
      $region32: #{zdiscriminator_forward.1} parent=11 // pred_fallthru
        _
      // Predicated region
      $region33: #{zdiscriminator_forward.1} parent=11 // pred_check
        %p238 = pneg %p180
      $region34: #{zdiscriminator_forward.1} parent=11 // pred_check_branch
        %240 = sbr.rel (%p238) target = $region36
      $region35: #{zdiscriminator_forward.1} parent=11 // pred_region
        _
      $region36: #{zdiscriminator_forward.1} parent=11 // pred_fallthru
        _
    $region12: #{zdiscriminator_forward.1} parent=5 // pred_fallthru
      _
    %p241 = scmp.lt.s32.totalorder %s14, 2
    // Predicated region
    $region37: #{zdiscriminator_forward.1} parent=5 // pred_check
      %p242 = pneg %p241
    $region38: #{zdiscriminator_forward.1} parent=5 // pred_check_branch
      %244 = sbr.rel (%p242) target = $region40
    $region39: #{zdiscriminator_forward.1} parent=5 // pred_region
      // Predicated region
      $region41: #{zdiscriminator_forward.1} parent=39 // pred_check
        %p245 = pneg %p48
      $region42: #{zdiscriminator_forward.1} parent=39 // pred_check_branch
        %247 = sbr.rel (%p245) target = $region44
      $region43: #{zdiscriminator_forward.1} parent=39 // pred_region
        %p248 = scmp.lt.s32.totalorder %s21, 1
        %s249 = scalar_select %p248, %s21, 1
        %p250 = scmp.lt.s32.totalorder %s22, 0
        %s251 = scalar_select %p250, %s22, 0
        %s252 = sadd.s32 %s251, %s249
        %s253 = smul.addr %s252, 8
        %s254 = scalar_lea.vmem %s0, %s253
      $region44: #{zdiscriminator_forward.1} parent=39 // pred_fallthru
        _
    $region40: #{zdiscriminator_forward.1} parent=5 // pred_fallthru
      _
    %p255 = scmp.le.s32.totalorder 1, %s14
    %p256 = scmp.lt.s32.totalorder %s14, 3
    %p257 = pnand %p255, %p256
    %p258 = pneg %p257
    // Predicated region
    $region45: #{zdiscriminator_forward.1} parent=5 // pred_check
      _
    $region46: #{zdiscriminator_forward.1} parent=5 // pred_check_branch
      %260 = sbr.rel (%p257) target = $region48
    $region47: #{zdiscriminator_forward.1} parent=5 // pred_region
      %s261 = ssub.s32 %s14, 1
      %p262 = scmp.lt.s32.totalorder %s23, 1
      %s263 = scalar_select %p262, %s23, 1
      %p264 = scmp.lt.s32.totalorder %s24, 0
      %s265 = scalar_select %p264, %s24, 0
      %s266 = sadd.s32 %s265, %s263
      %s267 = smul.addr %s266, 8
      %s268 = scalar_lea.vmem %s0, %s267
      %p269 = pneg %p54
      %p270 = pneg %p51
      %p271 = pneg %p75
      %p272 = pneg %p72
      %p273 = pneg %p96
      %p274 = pneg %p93
      %p275 = pneg %p117
      %p276 = pneg %p114
      %p277 = pneg %p138
      %p278 = pneg %p135
      %p279 = pneg %p159
      %p280 = pneg %p156
      %p281 = pneg %p180
      %p282 = pneg %p177
      %p283 = pneg %p208
      %p284 = pneg %p205
      %p285 = scmp.lt.s32.totalorder %s23, 1
      %s286 = scalar_select %p285, %s23, 1
      %p287 = scmp.lt.s32.totalorder %s24, 0
      %s288 = scalar_select %p287, %s24, 0
      %s289 = sadd.s32 %s288, %s286
      %s290 = scalar_lea.vmem %s7, %s289
      %p291 = scmp.lt.s32.totalorder %s23, 1
      %s292 = scalar_select %p291, %s23, 1
      %p293 = scmp.lt.s32.totalorder %s24, 0
      %s294 = scalar_select %p293, %s24, 0
      %s295 = sadd.s32 %s294, %s292
      %s296 = smul.addr %s295, 8
      %s297 = scalar_lea.vmem %s0, %s296
      %p298 = scmp.lt.s32.totalorder %s23, 1
      %s299 = scalar_select %p298, %s23, 1
      %p300 = scmp.lt.s32.totalorder %s24, 0
      %s301 = scalar_select %p300, %s24, 0
      %s302 = sadd.s32 %s301, %s299
      %s303 = scalar_lea.vmem %s7, %s302
      %v305 = vld [vmem:[%s297] sm:$0xff]
      %v306 = vpack.c.bf16 %v305, %v305
      %v307 = vld [vmem:[%s1] sm:$0xf]
      %v308 = vld [vmem:[%s1 + $0x4] sm:$0xf]
      %v309 = vld [vmem:[%s1 + $0x8] sm:$0xf]
      %v310 = vld [vmem:[%s1 + $0xc] sm:$0xf]
      %v311 = vld [vmem:[%s1 + $0x10] sm:$0xf]
      %v312 = vld [vmem:[%s1 + $0x14] sm:$0xf]
      %v313 = vld [vmem:[%s1 + $0x18] sm:$0xf]
      %v314 = vld [vmem:[%s1 + $0x1c] sm:$0xf]
      %v315 = vld [vmem:[%s1 + $0x20] sm:$0xf]
      %v316 = vld [vmem:[%s1 + $0x24] sm:$0xf]
      %v317 = vld [vmem:[%s1 + $0x28] sm:$0xf]
      %v318 = vld [vmem:[%s1 + $0x2c] sm:$0xf]
      %v319 = vld [vmem:[%s1 + $0x30] sm:$0xf]
      %v320 = vld [vmem:[%s1 + $0x34] sm:$0xf]
      %v321 = vld [vmem:[%s1 + $0x38] sm:$0xf]
      %v322 = vld [vmem:[%s1 + $0x3c] sm:$0xf]
      %v323 = vld [vmem:[%s2] sm:$0xff]
      %v324 = vld [vmem:[%s2 + $0x8] sm:$0xff]
      %v325 = vld [vmem:[%s2 + $0x10] sm:$0xff]
      %v326 = vld [vmem:[%s2 + $0x18] sm:$0xff]
      %v327 = vld [vmem:[%s2 + $0x20] sm:$0xff]
      %v328 = vld [vmem:[%s2 + $0x28] sm:$0xff]
      %v329 = vld [vmem:[%s2 + $0x30] sm:$0xff]
      %v330 = vld [vmem:[%s2 + $0x38] sm:$0xff]
      %v331 = vld [vmem:[%s2 + $0x40] sm:$0xff]
      %v332 = vld [vmem:[%s2 + $0x48] sm:$0xff]
      %v333 = vld [vmem:[%s2 + $0x50] sm:$0xff]
      %v334 = vld [vmem:[%s2 + $0x58] sm:$0xff]
      %v335 = vld [vmem:[%s2 + $0x60] sm:$0xff]
      %v336 = vld [vmem:[%s2 + $0x68] sm:$0xff]
      %v337 = vld [vmem:[%s2 + $0x70] sm:$0xff]
      %v338 = vld [vmem:[%s2 + $0x78] sm:$0xff]
      %340 = vset.pattern.permute.xlu0 0
      %341 = vperm.xlu0 %340, %v323
      %v342 = vpop.permute.xlu0 %341
      %345 = vset.pattern.permute.xlu0 0
      %346 = vperm.xlu0 %345, %v324
      %v347 = vpop.permute.xlu0 %346
      %350 = vset.pattern.permute.xlu0 0
      %351 = vperm.xlu0 %350, %v325
      %v352 = vpop.permute.xlu0 %351
      %355 = vset.pattern.permute.xlu0 0
      %356 = vperm.xlu0 %355, %v326
      %v357 = vpop.permute.xlu0 %356
      %360 = vset.pattern.permute.xlu0 0
      %361 = vperm.xlu0 %360, %v327
      %v362 = vpop.permute.xlu0 %361
      %365 = vset.pattern.permute.xlu0 0
      %366 = vperm.xlu0 %365, %v328
      %v367 = vpop.permute.xlu0 %366
      %370 = vset.pattern.permute.xlu0 0
      %371 = vperm.xlu0 %370, %v329
      %v372 = vpop.permute.xlu0 %371
      %375 = vset.pattern.permute.xlu0 0
      %376 = vperm.xlu0 %375, %v330
      %v377 = vpop.permute.xlu0 %376
      %380 = vset.pattern.permute.xlu0 0
      %381 = vperm.xlu0 %380, %v331
      %v382 = vpop.permute.xlu0 %381
      %385 = vset.pattern.permute.xlu0 0
      %386 = vperm.xlu0 %385, %v332
      %v387 = vpop.permute.xlu0 %386
      %390 = vset.pattern.permute.xlu0 0
      %391 = vperm.xlu0 %390, %v333
      %v392 = vpop.permute.xlu0 %391
      %395 = vset.pattern.permute.xlu0 0
      %396 = vperm.xlu0 %395, %v334
      %v397 = vpop.permute.xlu0 %396
      %400 = vset.pattern.permute.xlu0 0
      %401 = vperm.xlu0 %400, %v335
      %v402 = vpop.permute.xlu0 %401
      %405 = vset.pattern.permute.xlu0 0
      %406 = vperm.xlu0 %405, %v336
      %v407 = vpop.permute.xlu0 %406
      %410 = vset.pattern.permute.xlu0 0
      %411 = vperm.xlu0 %410, %v337
      %v412 = vpop.permute.xlu0 %411
      %415 = vset.pattern.permute.xlu0 0
      %416 = vperm.xlu0 %415, %v338
      %v417 = vpop.permute.xlu0 %416
      %v435 = vunpack.c.l.b16 %v307
      %v436 = vunpack.c.l.b16 %v308
      %v437 = vunpack.c.l.b16 %v309
      %v438 = vunpack.c.l.b16 %v310
      %v439 = vunpack.c.l.b16 %v311
      %v440 = vunpack.c.l.b16 %v312
      %v441 = vunpack.c.l.b16 %v313
      %v442 = vunpack.c.l.b16 %v314
      %v443 = vunpack.c.l.b16 %v315
      %v444 = vunpack.c.l.b16 %v316
      %v445 = vunpack.c.l.b16 %v317
      %v446 = vunpack.c.l.b16 %v318
      %v447 = vunpack.c.l.b16 %v319
      %v448 = vunpack.c.l.b16 %v320
      %v449 = vunpack.c.l.b16 %v321
      %v450 = vunpack.c.l.b16 %v322
      %v451 = vpack.c.b16 %v436, %v435
      %v452 = vpack.c.b16 %v438, %v437
      %v453 = vpack.c.b16 %v440, %v439
      %v454 = vpack.c.b16 %v442, %v441
      %v455 = vpack.c.b16 %v444, %v443
      %v456 = vpack.c.b16 %v446, %v445
      %v457 = vpack.c.b16 %v448, %v447
      %v458 = vpack.c.b16 %v450, %v449
      %vm459 = vcmask 64512
      %v461 = vsel %vm459, %v451, 0
      %v464 = vsel %vm459, %v452, 0
      %v467 = vsel %vm459, %v453, 0
      %v470 = vsel %vm459, %v454, 0
      %v473 = vsel %vm459, %v455, 0
      %v476 = vsel %vm459, %v456, 0
      %v479 = vsel %vm459, %v457, 0
      %v482 = vsel %vm459, %v458, 0
      %vm484 = vcmask 1043456
      %v486 = vsel %vm484, %v306, 0
      %488 = vmatprep.subr.bf16.mxu0 0
      %489 = vmatpush1.bf16.msra.mxu0 %v486
      %490 = vmatprep.subr.bf16.mxu0 0
      %491 = vmatpush1.bf16.msra.mxu0 0
      %492 = vmatprep.subr.bf16.mxu0 0
      %493 = vmatpush1.bf16.msra.mxu0 0
      %494 = vmatprep.subr.bf16.mxu0 0
      %495 = vmatpush1.bf16.msra.mxu0 0
      %496 = vmatprep.subr.bf16.mxu0 0
      %497 = vmatpush1.bf16.msra.mxu0 0
      %498 = vmatprep.subr.bf16.mxu0 0
      %499 = vmatpush1.bf16.msra.mxu0 0
      %500 = vmatprep.subr.bf16.mxu0 0
      %501 = vmatpush1.bf16.msra.mxu0 0
      %502 = vmatprep.subr.bf16.mxu0 0
      %503 = vmatpush1.bf16.msra.mxu0 0
      %504 = vmatprep.subr.bf16.mxu0 0
      %505 = vmatpush1.bf16.msra.mxu0 0
      %506 = vmatprep.subr.bf16.mxu0 0
      %507 = vmatpush1.bf16.msra.mxu0 0
      %508 = vmatprep.subr.bf16.mxu0 0
      %509 = vmatpush1.bf16.msra.mxu0 0
      %510 = vmatprep.subr.bf16.mxu0 0
      %511 = vmatpush1.bf16.msra.mxu0 0
      %512 = vmatprep.subr.bf16.mxu0 0
      %513 = vmatpush1.bf16.msra.mxu0 0
      %514 = vmatprep.subr.bf16.mxu0 0
      %515 = vmatpush1.bf16.msra.mxu0 0
      %516 = vmatprep.subr.bf16.mxu0 0
      %517 = vmatpush1.bf16.msra.mxu0 0
      %518 = vmatprep.subr.bf16.mxu0 0
      %519 = vmatpush1.bf16.msra.mxu0 0
      %520 = vmatprep.mubr.bf16.mxu0 0
      %521 = vmatmul.mubr.bf16.gmra.mrb[0].mxu0 %v461
      %v522 = vpop.f32.mrb[0].mxu0
      %v523 = vadd.f32 %v342, %v522
      %v524 = vpop.f32.mrb[0].mxu0
      %v525 = vpop.f32.mrb[0].mxu0
      %v526 = vadd.f32 %v347, %v525
      %v527 = vpop.f32.mrb[0].mxu0
      %528 = vmatprep.mubr.bf16.mxu0 0
      %529 = vmatmul.mubr.bf16.gmra.mrb[0].mxu0 %v464
      %v530 = vpop.f32.mrb[0].mxu0
      %v531 = vadd.f32 %v352, %v530
      %v532 = vpop.f32.mrb[0].mxu0
      %v533 = vpop.f32.mrb[0].mxu0
      %v534 = vadd.f32 %v357, %v533
      %v535 = vpop.f32.mrb[0].mxu0
      %536 = vmatprep.mubr.bf16.mxu0 0
      %537 = vmatmul.mubr.bf16.gmra.mrb[0].mxu0 %v467
      %v538 = vpop.f32.mrb[0].mxu0
      %v539 = vadd.f32 %v362, %v538
      %v540 = vpop.f32.mrb[0].mxu0
      %v541 = vpop.f32.mrb[0].mxu0
      %v542 = vadd.f32 %v367, %v541
      %v543 = vpop.f32.mrb[0].mxu0
      %544 = vmatprep.mubr.bf16.mxu0 0
      %545 = vmatmul.mubr.bf16.gmra.mrb[0].mxu0 %v470
      %v546 = vpop.f32.mrb[0].mxu0
      %v547 = vadd.f32 %v372, %v546
      %v548 = vpop.f32.mrb[0].mxu0
      %v549 = vpop.f32.mrb[0].mxu0
      %v550 = vadd.f32 %v377, %v549
      %v551 = vpop.f32.mrb[0].mxu0
      %552 = vmatprep.mubr.bf16.mxu0 0
      %553 = vmatmul.mubr.bf16.gmra.mrb[0].mxu0 %v473
      %v554 = vpop.f32.mrb[0].mxu0
      %v555 = vadd.f32 %v382, %v554
      %v556 = vpop.f32.mrb[0].mxu0
      %v557 = vpop.f32.mrb[0].mxu0
      %v558 = vadd.f32 %v387, %v557
      %v559 = vpop.f32.mrb[0].mxu0
      %560 = vmatprep.mubr.bf16.mxu0 0
      %561 = vmatmul.mubr.bf16.gmra.mrb[0].mxu0 %v476
      %v562 = vpop.f32.mrb[0].mxu0
      %v563 = vadd.f32 %v392, %v562
      %v564 = vpop.f32.mrb[0].mxu0
      %v565 = vpop.f32.mrb[0].mxu0
      %v566 = vadd.f32 %v397, %v565
      %v567 = vpop.f32.mrb[0].mxu0
      %568 = vmatprep.mubr.bf16.mxu0 0
      %569 = vmatmul.mubr.bf16.gmra.mrb[0].mxu0 %v479
      %v570 = vpop.f32.mrb[0].mxu0
      %v571 = vadd.f32 %v402, %v570
      %v572 = vpop.f32.mrb[0].mxu0
      %v573 = vpop.f32.mrb[0].mxu0
      %v574 = vadd.f32 %v407, %v573
      %v575 = vpop.f32.mrb[0].mxu0
      %576 = vmatprep.mubr.bf16.mxu0 0
      %577 = vmatmul.mubr.bf16.gmra.mrb[0].mxu0 %v482
      %v578 = vpop.f32.mrb[0].mxu0
      %v579 = vadd.f32 %v412, %v578
      %v580 = vpop.f32.mrb[0].mxu0
      %v581 = vpop.f32.mrb[0].mxu0
      %v582 = vadd.f32 %v417, %v581
      %v583 = vpop.f32.mrb[0].mxu0
      %584 = vdwg.mxu0
      %v585 = vmul.f32 %v523, 0.2
      %v586 = vmul.f32 %v526, 0.2
      %v587 = vmul.f32 %v531, 0.2
      %v588 = vmul.f32 %v534, 0.2
      %v589 = vmul.f32 %v539, 0.2
      %v590 = vmul.f32 %v542, 0.2
      %v591 = vmul.f32 %v547, 0.2
      %v592 = vmul.f32 %v550, 0.2
      %v593 = vmul.f32 %v555, 0.2
      %v594 = vmul.f32 %v558, 0.2
      %v595 = vmul.f32 %v563, 0.2
      %v596 = vmul.f32 %v566, 0.2
      %v597 = vmul.f32 %v571, 0.2
      %v598 = vmul.f32 %v574, 0.2
      %v599 = vmul.f32 %v579, 0.2
      %v600 = vmul.f32 %v582, 0.2
      %v601 = vmax.f32 %v523, %v585
      %v602 = vmax.f32 %v526, %v586
      %v603 = vmax.f32 %v531, %v587
      %v604 = vmax.f32 %v534, %v588
      %v605 = vmax.f32 %v539, %v589
      %v606 = vmax.f32 %v542, %v590
      %v607 = vmax.f32 %v547, %v591
      %v608 = vmax.f32 %v550, %v592
      %v609 = vmax.f32 %v555, %v593
      %v610 = vmax.f32 %v558, %v594
      %v611 = vmax.f32 %v563, %v595
      %v612 = vmax.f32 %v566, %v596
      %v613 = vmax.f32 %v571, %v597
      %v614 = vmax.f32 %v574, %v598
      %v615 = vmax.f32 %v579, %v599
      %v616 = vmax.f32 %v582, %v600
      %v617 = vld [vmem:[%s3] sm:$0xf]
      %v618 = vld [vmem:[%s3 + $0x4] sm:$0xf]
      %v619 = vld [vmem:[%s3 + $0x8] sm:$0xf]
      %v620 = vld [vmem:[%s3 + $0xc] sm:$0xf]
      %v621 = vld [vmem:[%s3 + $0x10] sm:$0xf]
      %v622 = vld [vmem:[%s3 + $0x14] sm:$0xf]
      %v623 = vld [vmem:[%s3 + $0x18] sm:$0xf]
      %v624 = vld [vmem:[%s3 + $0x1c] sm:$0xf]
      %v625 = vld [vmem:[%s3 + $0x20] sm:$0xf]
      %v626 = vld [vmem:[%s3 + $0x24] sm:$0xf]
      %v627 = vld [vmem:[%s3 + $0x28] sm:$0xf]
      %v628 = vld [vmem:[%s3 + $0x2c] sm:$0xf]
      %v629 = vld [vmem:[%s3 + $0x30] sm:$0xf]
      %v630 = vld [vmem:[%s3 + $0x34] sm:$0xf]
      %v631 = vld [vmem:[%s3 + $0x38] sm:$0xf]
      %v632 = vld [vmem:[%s3 + $0x3c] sm:$0xf]
      %v633 = vpack.c.bf16 %v602, %v601
      %v634 = vpack.c.bf16 %v604, %v603
      %v635 = vpack.c.bf16 %v606, %v605
      %v636 = vpack.c.bf16 %v608, %v607
      %v637 = vpack.c.bf16 %v610, %v609
      %v638 = vpack.c.bf16 %v612, %v611
      %v639 = vpack.c.bf16 %v614, %v613
      %v640 = vpack.c.bf16 %v616, %v615
      %v641 = vld [vmem:[%s4] sm:$0xff]
      %v642 = vld [vmem:[%s4 + $0x8] sm:$0xff]
      %v643 = vld [vmem:[%s4 + $0x10] sm:$0xff]
      %v644 = vld [vmem:[%s4 + $0x18] sm:$0xff]
      %v645 = vld [vmem:[%s4 + $0x20] sm:$0xff]
      %v646 = vld [vmem:[%s4 + $0x28] sm:$0xff]
      %v647 = vld [vmem:[%s4 + $0x30] sm:$0xff]
      %v648 = vld [vmem:[%s4 + $0x38] sm:$0xff]
      %v649 = vld [vmem:[%s4 + $0x40] sm:$0xff]
      %v650 = vld [vmem:[%s4 + $0x48] sm:$0xff]
      %v651 = vld [vmem:[%s4 + $0x50] sm:$0xff]
      %v652 = vld [vmem:[%s4 + $0x58] sm:$0xff]
      %v653 = vld [vmem:[%s4 + $0x60] sm:$0xff]
      %v654 = vld [vmem:[%s4 + $0x68] sm:$0xff]
      %v655 = vld [vmem:[%s4 + $0x70] sm:$0xff]
      %v656 = vld [vmem:[%s4 + $0x78] sm:$0xff]
      %658 = vset.pattern.permute.xlu0 0
      %659 = vperm.xlu0 %658, %v641
      %v660 = vpop.permute.xlu0 %659
      %663 = vset.pattern.permute.xlu0 0
      %664 = vperm.xlu0 %663, %v642
      %v665 = vpop.permute.xlu0 %664
      %668 = vset.pattern.permute.xlu0 0
      %669 = vperm.xlu0 %668, %v643
      %v670 = vpop.permute.xlu0 %669
      %673 = vset.pattern.permute.xlu0 0
      %674 = vperm.xlu0 %673, %v644
      %v675 = vpop.permute.xlu0 %674
      %678 = vset.pattern.permute.xlu0 0
      %679 = vperm.xlu0 %678, %v645
      %v680 = vpop.permute.xlu0 %679
      %683 = vset.pattern.permute.xlu0 0
      %684 = vperm.xlu0 %683, %v646
      %v685 = vpop.permute.xlu0 %684
      %688 = vset.pattern.permute.xlu0 0
      %689 = vperm.xlu0 %688, %v647
      %v690 = vpop.permute.xlu0 %689
      %693 = vset.pattern.permute.xlu0 0
      %694 = vperm.xlu0 %693, %v648
      %v695 = vpop.permute.xlu0 %694
      %698 = vset.pattern.permute.xlu0 0
      %699 = vperm.xlu0 %698, %v649
      %v700 = vpop.permute.xlu0 %699
      %703 = vset.pattern.permute.xlu0 0
      %704 = vperm.xlu0 %703, %v650
      %v705 = vpop.permute.xlu0 %704
      %708 = vset.pattern.permute.xlu0 0
      %709 = vperm.xlu0 %708, %v651
      %v710 = vpop.permute.xlu0 %709
      %713 = vset.pattern.permute.xlu0 0
      %714 = vperm.xlu0 %713, %v652
      %v715 = vpop.permute.xlu0 %714
      %718 = vset.pattern.permute.xlu0 0
      %719 = vperm.xlu0 %718, %v653
      %v720 = vpop.permute.xlu0 %719
      %723 = vset.pattern.permute.xlu0 0
      %724 = vperm.xlu0 %723, %v654
      %v725 = vpop.permute.xlu0 %724
      %728 = vset.pattern.permute.xlu0 0
      %729 = vperm.xlu0 %728, %v655
      %v730 = vpop.permute.xlu0 %729
      %733 = vset.pattern.permute.xlu0 0
      %734 = vperm.xlu0 %733, %v656
      %v735 = vpop.permute.xlu0 %734
      %v753 = vunpack.c.l.b16 %v617
      %v754 = vunpack.c.l.b16 %v618
      %v755 = vunpack.c.l.b16 %v619
      %v756 = vunpack.c.l.b16 %v620
      %v757 = vunpack.c.l.b16 %v621
      %v758 = vunpack.c.l.b16 %v622
      %v759 = vunpack.c.l.b16 %v623
      %v760 = vunpack.c.l.b16 %v624
      %v761 = vunpack.c.l.b16 %v625
      %v762 = vunpack.c.l.b16 %v626
      %v763 = vunpack.c.l.b16 %v627
      %v764 = vunpack.c.l.b16 %v628
      %v765 = vunpack.c.l.b16 %v629
      %v766 = vunpack.c.l.b16 %v630
      %v767 = vunpack.c.l.b16 %v631
      %v768 = vunpack.c.l.b16 %v632
      %v769 = vpack.c.b16 %v754, %v753
      %v770 = vpack.c.b16 %v756, %v755
      %v771 = vpack.c.b16 %v758, %v757
      %v772 = vpack.c.b16 %v760, %v759
      %v773 = vpack.c.b16 %v762, %v761
      %v774 = vpack.c.b16 %v764, %v763
      %v775 = vpack.c.b16 %v766, %v765
      %v776 = vpack.c.b16 %v768, %v767
      %785 = vmatprep.subr.bf16.mxu0 0
      %786 = vmatpush1.bf16.msra.mxu0 %v633
      %787 = vmatprep.subr.bf16.mxu0 0
      %788 = vmatpush1.bf16.msra.mxu0 %v634
      %789 = vmatprep.subr.bf16.mxu0 0
      %790 = vmatpush1.bf16.msra.mxu0 %v635
      %791 = vmatprep.subr.bf16.mxu0 0
      %792 = vmatpush1.bf16.msra.mxu0 %v636
      %793 = vmatprep.subr.bf16.mxu0 0
      %794 = vmatpush1.bf16.msra.mxu0 %v637
      %795 = vmatprep.subr.bf16.mxu0 0
      %796 = vmatpush1.bf16.msra.mxu0 %v638
      %797 = vmatprep.subr.bf16.mxu0 0
      %798 = vmatpush1.bf16.msra.mxu0 %v639
      %799 = vmatprep.subr.bf16.mxu0 0
      %800 = vmatpush1.bf16.msra.mxu0 %v640
      %801 = vmatprep.subr.bf16.mxu0 0
      %802 = vmatpush1.bf16.msra.mxu0 0
      %803 = vmatprep.subr.bf16.mxu0 0
      %804 = vmatpush1.bf16.msra.mxu0 0
      %805 = vmatprep.subr.bf16.mxu0 0
      %806 = vmatpush1.bf16.msra.mxu0 0
      %807 = vmatprep.subr.bf16.mxu0 0
      %808 = vmatpush1.bf16.msra.mxu0 0
      %809 = vmatprep.subr.bf16.mxu0 0
      %810 = vmatpush1.bf16.msra.mxu0 0
      %811 = vmatprep.subr.bf16.mxu0 0
      %812 = vmatpush1.bf16.msra.mxu0 0
      %813 = vmatprep.subr.bf16.mxu0 0
      %814 = vmatpush1.bf16.msra.mxu0 0
      %815 = vmatprep.subr.bf16.mxu0 0
      %816 = vmatpush1.bf16.msra.mxu0 0
      %817 = vmatprep.mubr.bf16.mxu0 0
      %818 = vmatmul.mubr.bf16.gmra.mrb[0].mxu0 %v769
      %v819 = vpop.f32.mrb[0].mxu0
      %v820 = vadd.f32 %v660, %v819
      %v821 = vpop.f32.mrb[0].mxu0
      %v822 = vpop.f32.mrb[0].mxu0
      %v823 = vadd.f32 %v665, %v822
      %v824 = vpop.f32.mrb[0].mxu0
      %825 = vmatprep.mubr.bf16.mxu0 0
      %826 = vmatmul.mubr.bf16.gmra.mrb[0].mxu0 %v770
      %v827 = vpop.f32.mrb[0].mxu0
      %v828 = vadd.f32 %v670, %v827
      %v829 = vpop.f32.mrb[0].mxu0
      %v830 = vpop.f32.mrb[0].mxu0
      %v831 = vadd.f32 %v675, %v830
      %v832 = vpop.f32.mrb[0].mxu0
      %833 = vmatprep.mubr.bf16.mxu0 0
      %834 = vmatmul.mubr.bf16.gmra.mrb[0].mxu0 %v771
      %v835 = vpop.f32.mrb[0].mxu0
      %v836 = vadd.f32 %v680, %v835
      %v837 = vpop.f32.mrb[0].mxu0
      %v838 = vpop.f32.mrb[0].mxu0
      %v839 = vadd.f32 %v685, %v838
      %v840 = vpop.f32.mrb[0].mxu0
      %841 = vmatprep.mubr.bf16.mxu0 0
      %842 = vmatmul.mubr.bf16.gmra.mrb[0].mxu0 %v772
      %v843 = vpop.f32.mrb[0].mxu0
      %v844 = vadd.f32 %v690, %v843
      %v845 = vpop.f32.mrb[0].mxu0
      %v846 = vpop.f32.mrb[0].mxu0
      %v847 = vadd.f32 %v695, %v846
      %v848 = vpop.f32.mrb[0].mxu0
      %849 = vmatprep.mubr.bf16.mxu0 0
      %850 = vmatmul.mubr.bf16.gmra.mrb[0].mxu0 %v773
      %v851 = vpop.f32.mrb[0].mxu0
      %v852 = vadd.f32 %v700, %v851
      %v853 = vpop.f32.mrb[0].mxu0
      %v854 = vpop.f32.mrb[0].mxu0
      %v855 = vadd.f32 %v705, %v854
      %v856 = vpop.f32.mrb[0].mxu0
      %857 = vmatprep.mubr.bf16.mxu0 0
      %858 = vmatmul.mubr.bf16.gmra.mrb[0].mxu0 %v774
      %v859 = vpop.f32.mrb[0].mxu0
      %v860 = vadd.f32 %v710, %v859
      %v861 = vpop.f32.mrb[0].mxu0
      %v862 = vpop.f32.mrb[0].mxu0
      %v863 = vadd.f32 %v715, %v862
      %v864 = vpop.f32.mrb[0].mxu0
      %865 = vmatprep.mubr.bf16.mxu0 0
      %866 = vmatmul.mubr.bf16.gmra.mrb[0].mxu0 %v775
      %v867 = vpop.f32.mrb[0].mxu0
      %v868 = vadd.f32 %v720, %v867
      %v869 = vpop.f32.mrb[0].mxu0
      %v870 = vpop.f32.mrb[0].mxu0
      %v871 = vadd.f32 %v725, %v870
      %v872 = vpop.f32.mrb[0].mxu0
      %873 = vmatprep.mubr.bf16.mxu0 0
      %874 = vmatmul.mubr.bf16.gmra.mrb[0].mxu0 %v776
      %v875 = vpop.f32.mrb[0].mxu0
      %v876 = vadd.f32 %v730, %v875
      %v877 = vpop.f32.mrb[0].mxu0
      %v878 = vpop.f32.mrb[0].mxu0
      %v879 = vadd.f32 %v735, %v878
      %v880 = vpop.f32.mrb[0].mxu0
      %881 = vdwg.mxu0
      %v882 = vmul.f32 %v820, 0.2
      %v883 = vmul.f32 %v823, 0.2
      %v884 = vmul.f32 %v828, 0.2
      %v885 = vmul.f32 %v831, 0.2
      %v886 = vmul.f32 %v836, 0.2
      %v887 = vmul.f32 %v839, 0.2
      %v888 = vmul.f32 %v844, 0.2
      %v889 = vmul.f32 %v847, 0.2
      %v890 = vmul.f32 %v852, 0.2
      %v891 = vmul.f32 %v855, 0.2
      %v892 = vmul.f32 %v860, 0.2
      %v893 = vmul.f32 %v863, 0.2
      %v894 = vmul.f32 %v868, 0.2
      %v895 = vmul.f32 %v871, 0.2
      %v896 = vmul.f32 %v876, 0.2
      %v897 = vmul.f32 %v879, 0.2
      %v898 = vmax.f32 %v820, %v882
      %v899 = vmax.f32 %v823, %v883
      %v900 = vmax.f32 %v828, %v884
      %v901 = vmax.f32 %v831, %v885
      %v902 = vmax.f32 %v836, %v886
      %v903 = vmax.f32 %v839, %v887
      %v904 = vmax.f32 %v844, %v888
      %v905 = vmax.f32 %v847, %v889
      %v906 = vmax.f32 %v852, %v890
      %v907 = vmax.f32 %v855, %v891
      %v908 = vmax.f32 %v860, %v892
      %v909 = vmax.f32 %v863, %v893
      %v910 = vmax.f32 %v868, %v894
      %v911 = vmax.f32 %v871, %v895
      %v912 = vmax.f32 %v876, %v896
      %v913 = vmax.f32 %v879, %v897
      %v914 = vld [vmem:[%s5] sm:$0x1]
      %v915 = vpack.c.bf16 %v899, %v898
      %v916 = vpack.c.bf16 %v901, %v900
      %v917 = vpack.c.bf16 %v903, %v902
      %v918 = vpack.c.bf16 %v905, %v904
      %v919 = vpack.c.bf16 %v907, %v906
      %v920 = vpack.c.bf16 %v909, %v908
      %v921 = vpack.c.bf16 %v911, %v910
      %v922 = vpack.c.bf16 %v913, %v912
      %s923 = sld [smem:[#allocation2]]
      %v924 = vstv %s923
      %925 = vmatprep.subr.bf16.mxu0 0
      %926 = vmatpush1.bf16.msra.mxu0 %v915
      %927 = vmatprep.subr.bf16.mxu0 0
      %928 = vmatpush1.bf16.msra.mxu0 %v916
      %929 = vmatprep.subr.bf16.mxu0 0
      %930 = vmatpush1.bf16.msra.mxu0 %v917
      %931 = vmatprep.subr.bf16.mxu0 0
      %932 = vmatpush1.bf16.msra.mxu0 %v918
      %933 = vmatprep.subr.bf16.mxu0 0
      %934 = vmatpush1.bf16.msra.mxu0 %v919
      %935 = vmatprep.subr.bf16.mxu0 0
      %936 = vmatpush1.bf16.msra.mxu0 %v920
      %937 = vmatprep.subr.bf16.mxu0 0
      %938 = vmatpush1.bf16.msra.mxu0 %v921
      %939 = vmatprep.subr.bf16.mxu0 0
      %940 = vmatpush1.bf16.msra.mxu0 %v922
      %941 = vmatprep.subr.bf16.mxu0 0
      %942 = vmatpush1.bf16.msra.mxu0 0
      %943 = vmatprep.subr.bf16.mxu0 0
      %944 = vmatpush1.bf16.msra.mxu0 0
      %945 = vmatprep.subr.bf16.mxu0 0
      %946 = vmatpush1.bf16.msra.mxu0 0
      %947 = vmatprep.subr.bf16.mxu0 0
      %948 = vmatpush1.bf16.msra.mxu0 0
      %949 = vmatprep.subr.bf16.mxu0 0
      %950 = vmatpush1.bf16.msra.mxu0 0
      %951 = vmatprep.subr.bf16.mxu0 0
      %952 = vmatpush1.bf16.msra.mxu0 0
      %953 = vmatprep.subr.bf16.mxu0 0
      %954 = vmatpush1.bf16.msra.mxu0 0
      %955 = vmatprep.subr.bf16.mxu0 0
      %956 = vmatpush1.bf16.msra.mxu0 0
      %957 = vmatprep.mubr.bf16.mxu0 0
      %958 = vmatmul.mubr.bf16.gmra.mrb[0].mxu0 %v914
      %v959 = vpop.f32.mrb[0].mxu0
      %v960 = vadd.f32 %v924, %v959
      %v961 = vpop.f32.mrb[0].mxu0
      %v962 = vpop.f32.mrb[0].mxu0
      %v963 = vpop.f32.mrb[0].mxu0
      %964 = vdwg.mxu0
      %v965 = vsub.f32 0.0, %v960
      %v966 = vmul.f32 %v965, 1.442695
      %v967 = vpow.pop %v966
      %v968 = vadd.f32 %v967, 1.0
      %v969 = vrcp.pop %v968
      %970 = vst [vmem:[%s303] sm:$0x1] %v969
      %p971 = scmp.lt.s32.totalorder %s23, 1
      %s972 = scalar_select %p971, %s23, 1
      %p973 = scmp.lt.s32.totalorder %s24, 0
      %s974 = scalar_select %p973, %s24, 0
      %s975 = sadd.s32 %s974, %s972
      %s976 = scalar_lea.vmem %s7, %s975
      // Predicated region
      $region49: #{zdiscriminator_forward.1} parent=47 // pred_check
        %p977 = pneg %p205
      $region50: #{zdiscriminator_forward.1} parent=47 // pred_check_branch
        %979 = sbr.rel (%p977) target = $region52
      $region51: #{zdiscriminator_forward.1} parent=47 // pred_region
        _
      $region52: #{zdiscriminator_forward.1} parent=47 // pred_fallthru
        _
    $region48: #{zdiscriminator_forward.1} parent=5 // pred_fallthru
      _
    %p980 = scmp.le.s32.totalorder 2, %s14
    // Predicated region
    $region53: #{zdiscriminator_forward.1} parent=5 // pred_check
      %p981 = pneg %p980
    $region54: #{zdiscriminator_forward.1} parent=5 // pred_check_branch
      %983 = sbr.rel (%p981) target = $region56
    $region55: #{zdiscriminator_forward.1} parent=5 // pred_region
      %s984 = ssub.s32 %s14, 2
      // Predicated region
      $region57: #{zdiscriminator_forward.1} parent=55 // pred_check
        %p985 = pneg %p211
      $region58: #{zdiscriminator_forward.1} parent=55 // pred_check_branch
        %987 = sbr.rel (%p985) target = $region60
      $region59: #{zdiscriminator_forward.1} parent=55 // pred_region
        %p988 = scmp.lt.s32.totalorder %s25, 1
        %s989 = scalar_select %p988, %s25, 1
        %p990 = scmp.lt.s32.totalorder %s26, 0
        %s991 = scalar_select %p990, %s26, 0
        %s992 = sadd.s32 %s991, %s989
        %s993 = scalar_lea.vmem %s7, %s992
      $region60: #{zdiscriminator_forward.1} parent=55 // pred_fallthru
        _
    $region56: #{zdiscriminator_forward.1} parent=5 // pred_fallthru
      _
  $region6: #{zdiscriminator_forward.1} parent=0 // loop_footer
    %s18 = sadd.s32 1, %s14
  $region7: #{zdiscriminator_forward.1} parent=0 // loop_footer_branch
    %13 = sbr.rel target = $region3
  $region8: #{zdiscriminator_forward.1} parent=0 // loop_exit
    _

</llo_original>
